<compile_context>
chip_gen: v5e
topology: v5e:2x2
jax: 0.10.0
libtpu: 0.0.40
codegen_flags: <defaults>
</compile_context>

<pallas_src>
import jax
import jax.numpy as jnp
from jax.experimental import pallas as pl
from jax.experimental.pallas import tpu as pltpu


def _round_up(v, m):
    return ((v + m - 1) // m) * m


def _processor_kernel(a_ref, x0_ref, w_ref, b_ref, o_ref, cat_ref):
    """One grid step: layer `l`, reduction tile `k` of the aggregation A @ x.

    o_ref (constant block index over the whole grid) is the resident
    node-feature buffer carried across layers.  cat_ref is the fused
    [agg | x] buffer the epilogue projection reads.
    """
    l = pl.program_id(0)
    k = pl.program_id(1)
    num_layers = pl.num_programs(0)
    num_k = pl.num_programs(1)
    tk = a_ref.shape[1]
    n_pad = o_ref.shape[0]
    f_pad = o_ref.shape[1]

    # Load the (padded) input features into the resident buffer once.
    @pl.when((l == 0) & (k == 0))
    def _():
        o_ref[...] = x0_ref[...]

    # Start of a layer: stage the current features as the "root" half of the
    # fused [agg | x] buffer and zero the aggregation half.
    @pl.when(k == 0)
    def _():
        cat_ref[:, f_pad:2 * f_pad] = o_ref[...]
        cat_ref[:, 0:f_pad] = jnp.zeros((n_pad, f_pad), jnp.float32)

    # agg += A[:, k*tk:(k+1)*tk] @ x[k*tk:(k+1)*tk, :]
    start = pl.multiple_of(k * tk, tk)
    x_k = o_ref[pl.ds(start, tk), :]
    cat_ref[:, 0:f_pad] += jnp.dot(a_ref[...], x_k,
                                   preferred_element_type=jnp.float32)

    # Epilogue: fused projection  out = [agg | x] @ [W_rel ; W_root] + b (+ReLU)
    @pl.when(k == num_k - 1)
    def _():
        out = jnp.dot(cat_ref[...], w_ref[...],
                      preferred_element_type=jnp.float32)
        out = out + b_ref[...]
        out = jnp.where(l < num_layers - 1, jnp.maximum(out, 0.0), out)
        o_ref[...] = out.astype(o_ref.dtype)


def processor_pallas(a_pad, x_pad, w_cat, b_cat):
    """Fused Processor forward on padded, lane-dense arrays.

    a_pad:  [N_pad, N_pad]           dense adjacency, A[i, j] = weight of j -> i
    x_pad:  [N_pad, F_pad]  float32  node features, zero padded
    w_cat:  [L, 2*F_pad, F_pad]      [W_rel ; W_root] per layer, zero padded
    b_cat:  [L, 1, F_pad]            bias per layer, zero padded
    returns [N_pad, F_pad] float32
    """
    n_pad = a_pad.shape[0]
    f_pad = x_pad.shape[1]
    n_layers = w_cat.shape[0]

    # Reduction tile over A's columns (lane axis of A).  Keep A whole while it
    # comfortably fits VMEM: its block index is then constant over the whole
    # grid and it is DMA'd from HBM exactly once for all layers.
    if n_pad <= 1024:
        tk = n_pad
    elif n_pad % 512 == 0:
        tk = 512
    elif n_pad % 256 == 0:
        tk = 256
    else:
        tk = 128
    assert n_pad % tk == 0
    num_k = n_pad // tk

    grid = (n_layers, num_k)  # reduction axis last

    in_specs = [
        pl.BlockSpec((n_pad, tk), lambda l, k: (0, k)),                  # A tile
        pl.BlockSpec((n_pad, f_pad), lambda l, k: (0, 0)),               # x0
        pl.BlockSpec((None, 2 * f_pad, f_pad), lambda l, k: (l, 0, 0)),  # W[l]
        pl.BlockSpec((None, 1, f_pad), lambda l, k: (l, 0, 0)),          # b[l]
    ]
    out_spec = pl.BlockSpec((n_pad, f_pad), lambda l, k: (0, 0))         # resident

    # VMEM budget: double-buffered A tiles + x0 + per-layer weights + resident
    # output block + fused [agg | x] scratch.
    est = 4 * (
        2 * n_pad * tk                         # A (double buffered)
        + 2 * n_pad * f_pad                    # x0
        + 2 * (2 * f_pad * f_pad + 8 * f_pad)  # W_cat[l], b[l]
        + 2 * n_pad * f_pad                    # output block
        + 2 * n_pad * f_pad                    # [agg | x] scratch
    )
    vmem_limit = int(min(max(2 * est, 8 * 2**20), 64 * 2**20))  # v7x-safe cap

    a_reads = 1 if num_k == 1 else n_layers
    cost = pl.CostEstimate(
        flops=int(n_layers * (2 * n_pad * n_pad * f_pad
                              + 2 * n_pad * (2 * f_pad) * f_pad)),
        transcendentals=0,
        bytes_accessed=int(4 * (a_reads * n_pad * n_pad
                                + 2 * n_pad * f_pad
                                + n_layers * (2 * f_pad * f_pad + f_pad))),
    )

    return pl.pallas_call(
        _processor_kernel,
        out_shape=jax.ShapeDtypeStruct((n_pad, f_pad), jnp.float32),
        grid_spec=pltpu.PrefetchScalarGridSpec(
            num_scalar_prefetch=0,
            grid=grid,
            in_specs=in_specs,
            out_specs=out_spec,
            scratch_shapes=[pltpu.VMEM((n_pad, 2 * f_pad), jnp.float32)],
        ),
        compiler_params=pltpu.CompilerParams(
            dimension_semantics=("arbitrary", "arbitrary"),
            vmem_limit_bytes=vmem_limit,
        ),
        cost_estimate=cost,
    )(a_pad, x_pad, w_cat, b_cat)


def init_processor_params(key, hops, feature_dim, latent_dim_proc, latent_dim):
    """Deterministic init mirroring the layer shapes of Processor.__init__."""
    dims = [(feature_dim, latent_dim_proc)]
    dims += [(latent_dim_proc, latent_dim_proc)] * (hops - 1)
    dims += [(latent_dim_proc, latent_dim)]
    params = []
    for fin, fout in dims:
        key, k1, k2, k3 = jax.random.split(key, 4)
        scale = 1.0 / jnp.sqrt(jnp.float32(fin))
        w_rel = jax.random.uniform(k1, (fin, fout), jnp.float32, -scale, scale)
        w_root = jax.random.uniform(k2, (fin, fout), jnp.float32, -scale, scale)
        b = jax.random.uniform(k3, (fout,), jnp.float32, -scale, scale)
        params.append((w_rel, w_root, b))
    return params


def _pack_params(params, f_pad):
    """Stack per-layer weights into lane-dense, zero-padded slabs.

    w_cat[l] = [[W_rel_l], [W_root_l]] padded to [2*f_pad, f_pad] so the
    projection is a single K = 2*f_pad matmul against [agg | x].
    """
    n_layers = len(params)
    w_cat = jnp.zeros((n_layers, 2 * f_pad, f_pad), jnp.float32)
    b_cat = jnp.zeros((n_layers, 1, f_pad), jnp.float32)
    for l, (w_rel, w_root, b) in enumerate(params):
        fin, fout = w_rel.shape
        w_cat = w_cat.at[l, :fin, :fout].set(w_rel)
        w_cat = w_cat.at[l, f_pad:f_pad + fin, :fout].set(w_root)
        b_cat = b_cat.at[l, 0, :fout].set(b)
    return w_cat, b_cat


def _dense_adjacency(n, edge_index, edge_weight, dtype=jnp.float32):
    src = edge_index[0]
    dst = edge_index[1]
    if edge_weight is None:
        edge_weight = jnp.ones(src.shape[0], jnp.float32)
    # A[i, j] = weight of edge j -> i (message from source j to target i).
    return jnp.zeros((n, n), dtype).at[dst, src].add(edge_weight.astype(dtype))


def processor_forward(params, x, edge_index, edge_weight=None,
                      adjacency_dtype=jnp.float32):
    """Forward pass of Processor: `hops` GraphConv+ReLU, then one GraphConv."""
    n, f_in = x.shape
    f_out_final = params[-1][0].shape[1]
    f_pad = _round_up(max([f_in] + [w.shape[1] for (w, _, _) in params]), 128)
    n_pad = max(_round_up(n, 128), 128)

    a_pad = _dense_adjacency(n_pad, edge_index, edge_weight, adjacency_dtype)
    x_pad = jnp.zeros((n_pad, f_pad), jnp.float32).at[:n, :f_in].set(x)
    w_cat, b_cat = _pack_params(params, f_pad)

    out_pad = processor_pallas(a_pad, x_pad, w_cat, b_cat)
    return out_pad[:n, :f_out_final]


def processor_reference(params, x, edge_index, edge_weight=None):
    """Pure-JAX reference for correctness checking."""
    n = x.shape[0]
    a = _dense_adjacency(n, edge_index, edge_weight)
    n_layers = len(params)
    hi = jax.lax.Precision.HIGHEST
    for i, (w_rel, w_root, b) in enumerate(params):
        agg = jnp.dot(a, x, precision=hi)
        out = (jnp.dot(agg, w_rel, precision=hi)
               + jnp.dot(x, w_root, precision=hi) + b[None, :])
        x = jnp.maximum(out, 0.0) if i < n_layers - 1 else out
    return x


if __name__ == "__main__":
    # Small, module-consistent shapes.
    hops = 3
    feature_dim = 8
    latent_dim_proc = 32
    latent_dim = 16
    num_nodes = 16
    num_edges = 48

    key = jax.random.PRNGKey(0)
    kx, ke_src, ke_dst, kw, kp = jax.random.split(key, 5)

    x = jax.random.normal(kx, (num_nodes, feature_dim), jnp.float32)
    edge_index = jnp.stack(
        [
            jax.random.randint(ke_src, (num_edges,), 0, num_nodes),
            jax.random.randint(ke_dst, (num_edges,), 0, num_nodes),
        ],
        axis=0,
    ).astype(jnp.int32)
    edge_weight = jax.random.uniform(kw, (num_edges,), jnp.float32, 0.1, 1.0)

    params = init_processor_params(kp, hops, feature_dim, latent_dim_proc, latent_dim)

    out = processor_forward(params, x, edge_index, edge_weight)
    out = jax.block_until_ready(out)

    ref = processor_reference(params, x, edge_index, edge_weight)
    assert out.shape == (num_nodes, latent_dim)
    assert jnp.allclose(out, ref, atol=1e-3, rtol=1e-3), float(
        jnp.max(jnp.abs(out - ref)))

    print("KERNEL_OK")
</pallas_src>

<mosaic_0001>
module attributes {stable_mosaic.version = 11 : i64} {
  func.func @_processor_kernel(%arg0: i32, %arg1: i32, %arg2: memref<128x128xf32, #tpu.memory_space<vmem>>, %arg3: memref<128x128xf32, #tpu.memory_space<vmem>>, %arg4: memref<1x256x128xf32, #tpu.memory_space<vmem>>, %arg5: memref<1x1x128xf32, #tpu.memory_space<vmem>>, %arg6: memref<128x128xf32, #tpu.memory_space<vmem>>, %arg7: memref<128x256xf32, #tpu.memory_space<vmem>>) attributes {dimension_semantics = [#tpu.dimension_semantics<arbitrary>, #tpu.dimension_semantics<arbitrary>], iteration_bounds = array<i64: 4, 1>, scalar_prefetch = 0 : i64, scratch_operands = 1 : i64, tpu.core_type = #tpu.core_type<tc>, window_params = [{transform_indices = @transform_0, window_bounds = array<i64: 128, 128>}, {pipeline_mode = #tpu.pipeline_mode<synchronous>, transform_indices = @transform_1, window_bounds = array<i64: 128, 128>}, {transform_indices = @transform_2, window_bounds = array<i64: 1, 256, 128>}, {transform_indices = @transform_3, window_bounds = array<i64: 1, 1, 128>}, {pipeline_mode = #tpu.pipeline_mode<synchronous>, transform_indices = @transform_4, window_bounds = array<i64: 128, 128>}]} {
    %c0_i32 = arith.constant 0 : i32
    %0 = arith.cmpi eq, %arg0, %c0_i32 : i32
    %c0_i32_0 = arith.constant 0 : i32
    %1 = arith.cmpi eq, %arg1, %c0_i32_0 : i32
    %2 = arith.andi %0, %1 : i1
    %3 = arith.extui %2 : i1 to i32
    %c0_i32_1 = arith.constant 0 : i32
    %4 = arith.cmpi ne, %3, %c0_i32_1 : i32
    scf.if %4 {
      %c0_12 = arith.constant 0 : index
      %c0_13 = arith.constant 0 : index
      %20 = vector.load %arg3[%c0_12, %c0_13] : memref<128x128xf32, #tpu.memory_space<vmem>>, vector<128x128xf32>
      %c0_14 = arith.constant 0 : index
      %c0_15 = arith.constant 0 : index
      %21 = vector.load %arg6[%c0_14, %c0_15] : memref<128x128xf32, #tpu.memory_space<vmem>>, vector<128x128xf32>
      tpu.vector_store %arg6[%c0_14, %c0_15], %20 {strides = array<i32>} : memref<128x128xf32, #tpu.memory_space<vmem>>, vector<128x128xf32>,
    } else {
    }
    %c0_i32_2 = arith.constant 0 : i32
    %5 = arith.cmpi eq, %arg1, %c0_i32_2 : i32
    %6 = arith.extui %5 : i1 to i32
    %c0_i32_3 = arith.constant 0 : i32
    %7 = arith.cmpi ne, %6, %c0_i32_3 : i32
    scf.if %7 {
      %c0_12 = arith.constant 0 : index
      %c0_13 = arith.constant 0 : index
      %20 = vector.load %arg6[%c0_12, %c0_13] : memref<128x128xf32, #tpu.memory_space<vmem>>, vector<128x128xf32>
      %c0_14 = arith.constant 0 : index
      %c128 = arith.constant 128 : index
      %21 = vector.load %arg7[%c0_14, %c128] : memref<128x256xf32, #tpu.memory_space<vmem>>, vector<128x128xf32>
      tpu.vector_store %arg7[%c0_14, %c128], %20 {strides = array<i32>} : memref<128x256xf32, #tpu.memory_space<vmem>>, vector<128x128xf32>,
      %cst_15 = arith.constant 0.000000e+00 : f32
      %22 = vector.broadcast %cst_15 : f32 to vector<128x128xf32>
      %c0_16 = arith.constant 0 : index
      %c0_17 = arith.constant 0 : index
      %23 = vector.load %arg7[%c0_16, %c0_17] : memref<128x256xf32, #tpu.memory_space<vmem>>, vector<128x128xf32>
      tpu.vector_store %arg7[%c0_16, %c0_17], %22 {strides = array<i32>} : memref<128x256xf32, #tpu.memory_space<vmem>>, vector<128x128xf32>,
    } else {
    }
    %c128_i32 = arith.constant 128 : i32
    %8 = arith.muli %arg1, %c128_i32 : i32
    %9 = tpu.assume_multiple %8, 128 : i32
    %10 = arith.index_cast %9 : i32 to index
    %c0 = arith.constant 0 : index
    %11 = vector.load %arg6[%10, %c0] : memref<128x128xf32, #tpu.memory_space<vmem>>, vector<128x128xf32>
    %c0_4 = arith.constant 0 : index
    %c0_5 = arith.constant 0 : index
    %12 = vector.load %arg7[%c0_4, %c0_5] : memref<128x256xf32, #tpu.memory_space<vmem>>, vector<128x128xf32>
    %c0_6 = arith.constant 0 : index
    %c0_7 = arith.constant 0 : index
    %13 = vector.load %arg2[%c0_6, %c0_7] : memref<128x128xf32, #tpu.memory_space<vmem>>, vector<128x128xf32>
    %cst = arith.constant dense<0.000000e+00> : vector<128x128xf32>
    %14 = tpu.matmul %13, %11, %cst {dimension_numbers = #tpu.dot_dimension_numbers<[1], [0], [0], [1], [0, 0, 1, 1], [], []>} : vector<128x128xf32>, vector<128x128xf32>, vector<128x128xf32> -> vector<128x128xf32>
    %15 = arith.addf %12, %14 : vector<128x128xf32>
    %c0_8 = arith.constant 0 : index
    %c0_9 = arith.constant 0 : index
    %16 = vector.load %arg7[%c0_8, %c0_9] : memref<128x256xf32, #tpu.memory_space<vmem>>, vector<128x128xf32>
    tpu.vector_store %arg7[%c0_8, %c0_9], %15 {strides = array<i32>} : memref<128x256xf32, #tpu.memory_space<vmem>>, vector<128x128xf32>,
    %c0_i32_10 = arith.constant 0 : i32
    %17 = arith.cmpi eq, %arg1, %c0_i32_10 : i32
    %18 = arith.extui %17 : i1 to i32
    %c0_i32_11 = arith.constant 0 : i32
    %19 = arith.cmpi ne, %18, %c0_i32_11 : i32
    scf.if %19 {
      %c0_12 = arith.constant 0 : index
      %c0_13 = arith.constant 0 : index
      %20 = vector.load %arg7[%c0_12, %c0_13] : memref<128x256xf32, #tpu.memory_space<vmem>>, vector<128x256xf32>
      %c0_14 = arith.constant 0 : index
      %c0_15 = arith.constant 0 : index
      %c0_16 = arith.constant 0 : index
      %21 = vector.load %arg4[%c0_14, %c0_15, %c0_16] : memref<1x256x128xf32, #tpu.memory_space<vmem>>, vector<1x256x128xf32>
      %22 = vector.shape_cast %21 : vector<1x256x128xf32> to vector<256x128xf32>
      %cst_17 = arith.constant dense<0.000000e+00> : vector<128x128xf32>
      %23 = tpu.matmul %20, %22, %cst_17 {dimension_numbers = #tpu.dot_dimension_numbers<[1], [0], [0], [1], [0, 0, 1, 1], [], []>} : vector<128x256xf32>, vector<256x128xf32>, vector<128x128xf32> -> vector<128x128xf32>
      %c0_18 = arith.constant 0 : index
      %c0_19 = arith.constant 0 : index
      %c0_20 = arith.constant 0 : index
      %24 = vector.load %arg5[%c0_18, %c0_19, %c0_20] : memref<1x1x128xf32, #tpu.memory_space<vmem>>, vector<1x1x128xf32>
      %25 = vector.shape_cast %24 : vector<1x1x128xf32> to vector<1x128xf32>
      %26 = vector.broadcast %25 : vector<1x128xf32> to vector<128x128xf32>
      %27 = arith.addf %23, %26 : vector<128x128xf32>
      %c3_i32 = arith.constant 3 : i32
      %28 = arith.cmpi slt, %arg0, %c3_i32 : i32
      %cst_21 = arith.constant 0.000000e+00 : f32
      %29 = vector.broadcast %cst_21 : f32 to vector<128x128xf32>
      %30 = arith.maximumf %27, %29 : vector<128x128xf32>
      %31 = arith.select %28, %30, %27 : vector<128x128xf32>
      %c0_22 = arith.constant 0 : index
      %c0_23 = arith.constant 0 : index
      %32 = vector.load %arg6[%c0_22, %c0_23] : memref<128x128xf32, #tpu.memory_space<vmem>>, vector<128x128xf32>
      tpu.vector_store %arg6[%c0_22, %c0_23], %31 {strides = array<i32>} : memref<128x128xf32, #tpu.memory_space<vmem>>, vector<128x128xf32>,
    } else {
    }
    return
  }
  func.func @transform_0(%arg0: i32, %arg1: i32) -> (i32, i32) {
    %c0_i32 = arith.constant 0 : i32
    %c0_i32_0 = arith.constant 0 : i32
    return %c0_i32, %arg1 : i32, i32
  }
  func.func @transform_1(%arg0: i32, %arg1: i32) -> (i32, i32) {
    %c0_i32 = arith.constant 0 : i32
    %c0_i32_0 = arith.constant 0 : i32
    %c0_i32_1 = arith.constant 0 : i32
    return %c0_i32, %c0_i32_0 : i32, i32
  }
  func.func @transform_2(%arg0: i32, %arg1: i32) -> (i32, i32, i32) {
    %c0_i32 = arith.constant 0 : i32
    %c0_i32_0 = arith.constant 0 : i32
    %c0_i32_1 = arith.constant 0 : i32
    return %arg0, %c0_i32, %c0_i32_0 : i32, i32, i32
  }
  func.func @transform_3(%arg0: i32, %arg1: i32) -> (i32, i32, i32) {
    %c0_i32 = arith.constant 0 : i32
    %c0_i32_0 = arith.constant 0 : i32
    %c0_i32_1 = arith.constant 0 : i32
    return %arg0, %c0_i32, %c0_i32_0 : i32, i32, i32
  }
  func.func @transform_4(%arg0: i32, %arg1: i32) -> (i32, i32) {
    %c0_i32 = arith.constant 0 : i32
    %c0_i32_0 = arith.constant 0 : i32
    %c0_i32_1 = arith.constant 0 : i32
    return %c0_i32, %c0_i32_0 : i32, i32
  }
}

</mosaic_0001>

<llo_original>
// kernel: tpu_custom_call.1
$region0: #{tpu_custom_call.1}
  #allocation0 [shape = 'u32[]', space=smem, size = 0x4, offset = 0x4, fixed_abs, tag = 'smem constant byte address 0x4 - core index']
  #allocation1 [shape = 'u32[72,128]{1,0:T(1,128)}', space=vmem, size = 0x9000, scoped, tag = 'internal scratch']
  #allocation2 [shape = 'f32[128,256]{1,0:T(8,128)}', space=vmem, size = 0x20000, scoped, tag = 'scratch operand']
  %s0 = inlined_call_operand.hbm [shape: f32[128,128], index: 0, kind: input, shape index: {}]
  %s1 = inlined_call_operand.hbm [shape: f32[128,128], index: 1, kind: input, shape index: {}]
  %s2 = inlined_call_operand.hbm [shape: f32[4,256,128], index: 2, kind: input, shape index: {}]
  %s3 = inlined_call_operand.hbm [shape: f32[4,1,128], index: 3, kind: input, shape index: {}]
  %s4 = inlined_call_operand.hbm [shape: f32[128,128], index: 4, kind: output, shape index: {}]
  %s5 = sld [smem:[#allocation0]]
  $region77: #{tpu_custom_call.1} parent=0
    _
  %s7 = ssub.s32 1, %s5
  %s8 = scalar_select 0, %s7, %s5
  $region1: #{tpu_custom_call.1} parent=0
    #allocation3 [shape = 'u8[65536]{0}', space=vmem, size = 0x10000, scoped, tag = 'input window, operand 0, single buffered']
    #allocation4 [shape = 's32[2]{0}', space=sflag, size = 0x8, scoped, tag = 'scoped memory for tpu_custom_call.1']
    #allocation5 [shape = 's32[2]{0}', space=sflag, size = 0x8, scoped, tag = 'scoped memory for tpu_custom_call.1']
    #allocation6 [shape = 'u8[65536]{0}', space=vmem, size = 0x10000, scoped, tag = 'input window, operand 1, single buffered']
    #allocation7 [shape = 's32[1]{0}', space=sflag, size = 0x4, scoped, tag = 'scoped memory for tpu_custom_call.1']
    #allocation8 [shape = 'u8[262144]{0}', space=vmem, size = 0x40000, scoped, tag = 'input window, operand 2']
    #allocation9 [shape = 'u8[1024]{0}', space=vmem, size = 0x400, scoped, tag = 'input window, operand 3']
    #allocation10 [shape = 'u8[65536]{0}', space=vmem, size = 0x10000, scoped, tag = 'output window, operand 0, single buffered']
    %9 = vsyncpa [#allocation4], 0
    %10 = vsyncpa [#allocation7], 0
    %11 = vsyncpa [#allocation5], 0
    loop: start=0, step=1, limit=6
    $region2: #{tpu_custom_call.1} parent=1 // loop_pre_header
      _
    $region3: #{tpu_custom_call.1} parent=1 // loop_header
      %s13 = sphi 0, %s17
      %p14 = scmp.ge.s32.totalorder %s13, 6
      %s20 = sphi 0, %s32
      %s21 = sphi 0, %s28
      %s22 = sphi 0, %s20
      %s23 = sphi 0, %s21
      %s24 = sphi 0, %s22
      %s25 = sphi 0, %s23
      %s35 = sphi 0, %s37
      %s38 = sphi 0, %s35
      %s39 = sphi 0, %s38
      %s55 = sphi 0, %s39
      %s59 = sphi 0, %s59
      %s61 = sphi 0, %s59
      %s62 = sphi 0, %s61
      %s76 = sphi 0, %s62
      %s82 = sphi 0, %s84
      %s85 = sphi 0, %s82
      %s86 = sphi 0, %s85
      %s102 = sphi 0, %s86
      %s108 = sphi 0, %s110
      %s111 = sphi 0, %s108
      %s112 = sphi 0, %s111
      %s128 = sphi 0, %s112
      %s132 = sphi 0, %s132
      %s134 = sphi 0, %s132
      %s135 = sphi 0, %s134
      %s149 = sphi 0, %s135
    $region4: #{tpu_custom_call.1} parent=1 // loop_header_branch
      %16 = sbr.rel (%p14) target = $region8
    $region5: #{tpu_custom_call.1} parent=1 // loop_body
      %s18 = ssub.s32 %s13, 1
      %s19 = ssub.s32 %s13, 2
      %s26 = sadd.s32 1, %s21
      %p27 = scmp.ge.s32.totalorder %s26, 1
      %s28 = scalar_select %p27, 0, %s26
      %s29 = sadd.s32 1, %s20
      %s30 = scalar_select %p27, %s29, %s20
      %p31 = scmp.ge.s32.totalorder %s30, 4
      %s32 = scalar_select %p31, 0, %s30
      %s33 = ssub.s32 %s21, %s28
      %p34 = scmp.eq.s32.totalorder %s33, 0
      %s36 = sadd.s32 %s35, 1
      %s37 = scalar_select %p34, %s35, %s36
      %p40 = pneg %p34
      %p41 = scmp.eq.s32.totalorder %s13, 3
      %p42 = por %p40, %p41
      %p43 = scmp.ne.s32.totalorder %s35, %s38
      %p44 = scmp.eq.s32.totalorder %s13, 0
      %p45 = por %p43, %p44
      %p46 = scmp.ne.s32.totalorder %s35, %s38
      %p47 = scmp.eq.s32.totalorder %s18, 3
      %p48 = por %p46, %p47
      %p49 = scmp.ne.s32.totalorder %s38, %s39
      %p50 = scmp.eq.s32.totalorder %s18, 0
      %p51 = por %p49, %p50
      %p52 = scmp.ne.s32.totalorder %s38, %s39
      %p53 = scmp.eq.s32.totalorder %s19, 3
      %p54 = por %p52, %p53
      %p56 = scmp.ne.s32.totalorder %s39, %s55
      %p57 = scmp.eq.s32.totalorder %s19, 0
      %p58 = por %p56, %p57
      %s60 = sadd.s32 %s59, 1
      %p63 = scmp.eq.s32.totalorder %s13, 3
      %p64 = scmp.ne.s32.totalorder %s59, %s61
      %p65 = scmp.eq.s32.totalorder %s13, 0
      %p66 = por %p64, %p65
      %p67 = scmp.ne.s32.totalorder %s59, %s61
      %p68 = scmp.eq.s32.totalorder %s18, 3
      %p69 = por %p67, %p68
      %p70 = scmp.ne.s32.totalorder %s61, %s62
      %p71 = scmp.eq.s32.totalorder %s18, 0
      %p72 = por %p70, %p71
      %p73 = scmp.ne.s32.totalorder %s61, %s62
      %p74 = scmp.eq.s32.totalorder %s19, 3
      %p75 = por %p73, %p74
      %p77 = scmp.ne.s32.totalorder %s62, %s76
      %p78 = scmp.eq.s32.totalorder %s19, 0
      %p79 = por %p77, %p78
      %s80 = ssub.s32 %s20, %s32
      %p81 = scmp.eq.s32.totalorder %s80, 0
      %s83 = sadd.s32 %s82, 1
      %s84 = scalar_select %p81, %s82, %s83
      %p87 = pneg %p81
      %p88 = scmp.eq.s32.totalorder %s13, 3
      %p89 = por %p87, %p88
      %p90 = scmp.ne.s32.totalorder %s82, %s85
      %p91 = scmp.eq.s32.totalorder %s13, 0
      %p92 = por %p90, %p91
      %p93 = scmp.ne.s32.totalorder %s82, %s85
      %p94 = scmp.eq.s32.totalorder %s18, 3
      %p95 = por %p93, %p94
      %p96 = scmp.ne.s32.totalorder %s85, %s86
      %p97 = scmp.eq.s32.totalorder %s18, 0
      %p98 = por %p96, %p97
      %p99 = scmp.ne.s32.totalorder %s85, %s86
      %p100 = scmp.eq.s32.totalorder %s19, 3
      %p101 = por %p99, %p100
      %p103 = scmp.ne.s32.totalorder %s86, %s102
      %p104 = scmp.eq.s32.totalorder %s19, 0
      %p105 = por %p103, %p104
      %s106 = ssub.s32 %s20, %s32
      %p107 = scmp.eq.s32.totalorder %s106, 0
      %s109 = sadd.s32 %s108, 1
      %s110 = scalar_select %p107, %s108, %s109
      %p113 = pneg %p107
      %p114 = scmp.eq.s32.totalorder %s13, 3
      %p115 = por %p113, %p114
      %p116 = scmp.ne.s32.totalorder %s108, %s111
      %p117 = scmp.eq.s32.totalorder %s13, 0
      %p118 = por %p116, %p117
      %p119 = scmp.ne.s32.totalorder %s108, %s111
      %p120 = scmp.eq.s32.totalorder %s18, 3
      %p121 = por %p119, %p120
      %p122 = scmp.ne.s32.totalorder %s111, %s112
      %p123 = scmp.eq.s32.totalorder %s18, 0
      %p124 = por %p122, %p123
      %p125 = scmp.ne.s32.totalorder %s111, %s112
      %p126 = scmp.eq.s32.totalorder %s19, 3
      %p127 = por %p125, %p126
      %p129 = scmp.ne.s32.totalorder %s112, %s128
      %p130 = scmp.eq.s32.totalorder %s19, 0
      %p131 = por %p129, %p130
      %s133 = sadd.s32 %s132, 1
      %p136 = scmp.eq.s32.totalorder %s13, 3
      %p137 = scmp.ne.s32.totalorder %s132, %s134
      %p138 = scmp.eq.s32.totalorder %s13, 0
      %p139 = por %p137, %p138
      %p140 = scmp.ne.s32.totalorder %s132, %s134
      %p141 = scmp.eq.s32.totalorder %s18, 3
      %p142 = por %p140, %p141
      %p143 = scmp.ne.s32.totalorder %s134, %s135
      %p144 = scmp.eq.s32.totalorder %s18, 0
      %p145 = por %p143, %p144
      %p146 = scmp.ne.s32.totalorder %s134, %s135
      %p147 = scmp.eq.s32.totalorder %s19, 3
      %p148 = por %p146, %p147
      %p150 = scmp.ne.s32.totalorder %s135, %s149
      %p151 = scmp.eq.s32.totalorder %s19, 0
      %p152 = por %p150, %p151
      %p153 = scmp.le.s32.totalorder 1, %s13
      %p154 = scmp.lt.s32.totalorder %s13, 5
      %p155 = pnand %p153, %p154
      %p156 = pneg %p155
      // Predicated region
      $region9: #{tpu_custom_call.1} parent=5 // pred_check
        _
      $region10: #{tpu_custom_call.1} parent=5 // pred_check_branch
        %158 = sbr.rel (%p155) target = $region12
      $region11: #{tpu_custom_call.1} parent=5 // pred_region
        %s159 = ssub.s32 %s13, 1
        // Predicated region
        $region13: #{tpu_custom_call.1} parent=11 // pred_check
          %p160 = pneg %p51
        $region14: #{tpu_custom_call.1} parent=11 // pred_check_branch
          %162 = sbr.rel (%p160) target = $region16
        $region15: #{tpu_custom_call.1} parent=11 // pred_region
          %164 = vsyncadd [#allocation4], 0
          %s165 = smul.addr %s23, 8
          %s166 = scalar_lea.hbm %s0, %s165
          %s167 = sshll.u32 %s166, 4
          %s168 = int_to_ptr.hbm [resolvable:$true] %s167
          %s169 = sshll.u32 [#allocation3], 4
          %s170 = int_to_ptr.vmem [resolvable:$true] %s169
          %175 = dma.hbm_to_vmem [thread:$0]  %s168, 2048, %s170, [#allocation4], 128, 128, 8
        $region16: #{tpu_custom_call.1} parent=11 // pred_fallthru
          _
        // Predicated region
        $region17: #{tpu_custom_call.1} parent=11 // pred_check
          %p176 = pneg %p72
        $region18: #{tpu_custom_call.1} parent=11 // pred_check_branch
          %178 = sbr.rel (%p176) target = $region20
        $region19: #{tpu_custom_call.1} parent=11 // pred_region
          %180 = vsyncadd [#allocation7], 0
          %s181 = sshll.u32 %s1, 4
          %s182 = int_to_ptr.hbm [resolvable:$true] %s181
          %s183 = sshll.u32 [#allocation6], 4
          %s184 = int_to_ptr.vmem [resolvable:$true] %s183
          %189 = dma.hbm_to_vmem [thread:$0]  %s182, 2048, %s184, [#allocation7], 128, 128, 8
        $region20: #{tpu_custom_call.1} parent=11 // pred_fallthru
          _
      $region12: #{tpu_custom_call.1} parent=5 // pred_fallthru
        _
      %p190 = scmp.lt.s32.totalorder %s13, 4
      // Predicated region
      $region21: #{tpu_custom_call.1} parent=5 // pred_check
        %p191 = pneg %p190
      $region22: #{tpu_custom_call.1} parent=5 // pred_check_branch
        %193 = sbr.rel (%p191) target = $region24
      $region23: #{tpu_custom_call.1} parent=5 // pred_region
        // Predicated region
        $region25: #{tpu_custom_call.1} parent=23 // pred_check
          %p194 = pneg %p92
        $region26: #{tpu_custom_call.1} parent=23 // pred_check_branch
          %196 = sbr.rel (%p194) target = $region28
        $region27: #{tpu_custom_call.1} parent=23 // pred_region
          %s197 = sand.u32 %s13, 1
          %s198 = scalar_lea.sflag [#allocation4], %s197
          %s199 = sand.u32 %s82, 1
          %s200 = smul.addr %s199, 256
          %s201 = scalar_lea.vmem [#allocation8], %s200
          %203 = vsyncadd %s198, 0
          %s204 = smul.addr %s20, 32
          %s205 = smul.addr %s204, 8
          %s206 = scalar_lea.hbm %s2, %s205
          %s207 = sshll.u32 %s206, 4
          %s208 = int_to_ptr.hbm [resolvable:$true] %s207
          %s209 = sshll.u32 %s201, 4
          %s210 = int_to_ptr.vmem [resolvable:$true] %s209
          %215 = dma.hbm_to_vmem [thread:$0]  %s208, 4096, %s210, %s198, 128, 128, 8
        $region28: #{tpu_custom_call.1} parent=23 // pred_fallthru
          _
        // Predicated region
        $region29: #{tpu_custom_call.1} parent=23 // pred_check
          %p216 = pneg %p118
        $region30: #{tpu_custom_call.1} parent=23 // pred_check_branch
          %218 = sbr.rel (%p216) target = $region32
        $region31: #{tpu_custom_call.1} parent=23 // pred_region
          %s219 = sand.u32 %s13, 1
          %s220 = scalar_lea.sflag [#allocation4], %s219
          %s221 = sand.u32 %s108, 1
          %s222 = scalar_lea.vmem [#allocation9], %s221
          %224 = vsyncadd %s220, 0
          %s225 = scalar_lea.hbm %s3, %s20
          %s227 = sshll.u32 %s225, 4
          %s228 = int_to_ptr.hbm [resolvable:$true] %s227
          %s229 = sshll.u32 %s222, 4
          %s230 = int_to_ptr.vmem [resolvable:$true] %s229
          %232 = dma.hbm_to_vmem [thread:$0]  %s228, 16, %s230, %s220
        $region32: #{tpu_custom_call.1} parent=23 // pred_fallthru
          _
      $region24: #{tpu_custom_call.1} parent=5 // pred_fallthru
        _
      %p233 = scmp.le.s32.totalorder 1, %s13
      %p234 = scmp.lt.s32.totalorder %s13, 5
      %p235 = pnand %p233, %p234
      %p236 = pneg %p235
      // Predicated region
      $region33: #{tpu_custom_call.1} parent=5 // pred_check
        _
      $region34: #{tpu_custom_call.1} parent=5 // pred_check_branch
        %238 = sbr.rel (%p235) target = $region36
      $region35: #{tpu_custom_call.1} parent=5 // pred_region
        %s239 = ssub.s32 %s13, 1
        // Predicated region
        $region37: #{tpu_custom_call.1} parent=35 // pred_check
          %p240 = pneg %p51
        $region38: #{tpu_custom_call.1} parent=35 // pred_check_branch
          %242 = sbr.rel (%p240) target = $region40
        $region39: #{tpu_custom_call.1} parent=35 // pred_region
          %244 = dma.done [#allocation4], 2048
        $region40: #{tpu_custom_call.1} parent=35 // pred_fallthru
          _
        // Predicated region
        $region41: #{tpu_custom_call.1} parent=35 // pred_check
          %p245 = pneg %p72
        $region42: #{tpu_custom_call.1} parent=35 // pred_check_branch
          %247 = sbr.rel (%p245) target = $region44
        $region43: #{tpu_custom_call.1} parent=35 // pred_region
          %249 = dma.done [#allocation7], 2048
        $region44: #{tpu_custom_call.1} parent=35 // pred_fallthru
          _
        %s250 = sand.u32 %s18, 1
        %s251 = scalar_lea.sflag [#allocation4], %s250
        %s252 = sand.u32 %s85, 1
        %s253 = smul.addr %s252, 256
        %s254 = scalar_lea.vmem [#allocation8], %s253
        // Predicated region
        $region45: #{tpu_custom_call.1} parent=35 // pred_check
          %p255 = pneg %p98
        $region46: #{tpu_custom_call.1} parent=35 // pred_check_branch
          %257 = sbr.rel (%p255) target = $region48
        $region47: #{tpu_custom_call.1} parent=35 // pred_region
          %259 = dma.done %s251, 4096
        $region48: #{tpu_custom_call.1} parent=35 // pred_fallthru
          _
        %s260 = sand.u32 %s18, 1
        %s261 = scalar_lea.sflag [#allocation4], %s260
        %s262 = sand.u32 %s111, 1
        %s263 = scalar_lea.vmem [#allocation9], %s262
        // Predicated region
        $region49: #{tpu_custom_call.1} parent=35 // pred_check
          %p264 = pneg %p124
        $region50: #{tpu_custom_call.1} parent=35 // pred_check_branch
          %266 = sbr.rel (%p264) target = $region52
        $region51: #{tpu_custom_call.1} parent=35 // pred_region
          %268 = dma.done %s261, 16
        $region52: #{tpu_custom_call.1} parent=35 // pred_fallthru
          _
        %p269 = pneg %p51
        %p270 = pneg %p48
        %p271 = pneg %p72
        %p272 = pneg %p69
        %s273 = sand.u32 %s18, 1
        %s274 = scalar_lea.sflag [#allocation4], %s273
        %s275 = sand.u32 %s85, 1
        %s276 = smul.addr %s275, 256
        %s277 = scalar_lea.vmem [#allocation8], %s276
        %p278 = pneg %p98
        %p279 = pneg %p95
        %s280 = sand.u32 %s18, 1
        %s281 = scalar_lea.sflag [#allocation4], %s280
        %s282 = sand.u32 %s111, 1
        %s283 = scalar_lea.vmem [#allocation9], %s282
        %p284 = pneg %p124
        %p285 = pneg %p121
        %p286 = pneg %p145
        %p287 = pneg %p142
        %p288 = scmp.eq.s32.totalorder %s22, 0
        %p289 = scmp.eq.s32.totalorder %s23, 0
        %p290 = pnand %p288, %p289
        %p291 = pneg %p290
        // Predicated region
        $region53: #{tpu_custom_call.1} parent=35 // pred_check
          _
        $region54: #{tpu_custom_call.1} parent=35 // pred_check_branch
          %293 = sbr.rel (%p290) target = $region56
        $region55: #{tpu_custom_call.1} parent=35 // pred_region
          %v294 = vld [vmem:[#allocation6] sm:$0xff]
          %v295 = vld [vmem:[#allocation6 + $0x8] sm:$0xff]
          %v296 = vld [vmem:[#allocation6 + $0x10] sm:$0xff]
          %v297 = vld [vmem:[#allocation6 + $0x18] sm:$0xff]
          %v298 = vld [vmem:[#allocation6 + $0x20] sm:$0xff]
          %v299 = vld [vmem:[#allocation6 + $0x28] sm:$0xff]
          %v300 = vld [vmem:[#allocation6 + $0x30] sm:$0xff]
          %v301 = vld [vmem:[#allocation6 + $0x38] sm:$0xff]
          %v302 = vld [vmem:[#allocation6 + $0x40] sm:$0xff]
          %v303 = vld [vmem:[#allocation6 + $0x48] sm:$0xff]
          %v304 = vld [vmem:[#allocation6 + $0x50] sm:$0xff]
          %v305 = vld [vmem:[#allocation6 + $0x58] sm:$0xff]
          %v306 = vld [vmem:[#allocation6 + $0x60] sm:$0xff]
          %v307 = vld [vmem:[#allocation6 + $0x68] sm:$0xff]
          %v308 = vld [vmem:[#allocation6 + $0x70] sm:$0xff]
          %v309 = vld [vmem:[#allocation6 + $0x78] sm:$0xff]
          %310 = vst [vmem:[#allocation10] sm:$0xff] %v294
          %311 = vst [vmem:[#allocation10 + $0x8] sm:$0xff] %v295
          %312 = vst [vmem:[#allocation10 + $0x10] sm:$0xff] %v296
          %313 = vst [vmem:[#allocation10 + $0x18] sm:$0xff] %v297
          %314 = vst [vmem:[#allocation10 + $0x20] sm:$0xff] %v298
          %315 = vst [vmem:[#allocation10 + $0x28] sm:$0xff] %v299
          %316 = vst [vmem:[#allocation10 + $0x30] sm:$0xff] %v300
          %317 = vst [vmem:[#allocation10 + $0x38] sm:$0xff] %v301
          %318 = vst [vmem:[#allocation10 + $0x40] sm:$0xff] %v302
          %319 = vst [vmem:[#allocation10 + $0x48] sm:$0xff] %v303
          %320 = vst [vmem:[#allocation10 + $0x50] sm:$0xff] %v304
          %321 = vst [vmem:[#allocation10 + $0x58] sm:$0xff] %v305
          %322 = vst [vmem:[#allocation10 + $0x60] sm:$0xff] %v306
          %323 = vst [vmem:[#allocation10 + $0x68] sm:$0xff] %v307
          %324 = vst [vmem:[#allocation10 + $0x70] sm:$0xff] %v308
          %325 = vst [vmem:[#allocation10 + $0x78] sm:$0xff] %v309
        $region56: #{tpu_custom_call.1} parent=35 // pred_fallthru
          _
        // Predicated region
        $region57: #{tpu_custom_call.1} parent=35 // pred_check
          %p326 = pneg %p289
        $region58: #{tpu_custom_call.1} parent=35 // pred_check_branch
          %328 = sbr.rel (%p326) target = $region60
        $region59: #{tpu_custom_call.1} parent=35 // pred_region
          %v329 = vld [vmem:[#allocation10] sm:$0xff]
          %v330 = vld [vmem:[#allocation10 + $0x8] sm:$0xff]
          %v331 = vld [vmem:[#allocation10 + $0x10] sm:$0xff]
          %v332 = vld [vmem:[#allocation10 + $0x18] sm:$0xff]
          %v333 = vld [vmem:[#allocation10 + $0x20] sm:$0xff]
          %v334 = vld [vmem:[#allocation10 + $0x28] sm:$0xff]
          %v335 = vld [vmem:[#allocation10 + $0x30] sm:$0xff]
          %v336 = vld [vmem:[#allocation10 + $0x38] sm:$0xff]
          %v337 = vld [vmem:[#allocation10 + $0x40] sm:$0xff]
          %v338 = vld [vmem:[#allocation10 + $0x48] sm:$0xff]
          %v339 = vld [vmem:[#allocation10 + $0x50] sm:$0xff]
          %v340 = vld [vmem:[#allocation10 + $0x58] sm:$0xff]
          %v341 = vld [vmem:[#allocation10 + $0x60] sm:$0xff]
          %v342 = vld [vmem:[#allocation10 + $0x68] sm:$0xff]
          %v343 = vld [vmem:[#allocation10 + $0x70] sm:$0xff]
          %v344 = vld [vmem:[#allocation10 + $0x78] sm:$0xff]
          %345 = vst [vmem:[#allocation2 + $0x8] sm:$0xff] %v329
          %346 = vst [vmem:[#allocation2 + $0x18] sm:$0xff] %v330
          %347 = vst [vmem:[#allocation2 + $0x28] sm:$0xff] %v331
          %348 = vst [vmem:[#allocation2 + $0x38] sm:$0xff] %v332
          %349 = vst [vmem:[#allocation2 + $0x48] sm:$0xff] %v333
          %350 = vst [vmem:[#allocation2 + $0x58] sm:$0xff] %v334
          %351 = vst [vmem:[#allocation2 + $0x68] sm:$0xff] %v335
          %352 = vst [vmem:[#allocation2 + $0x78] sm:$0xff] %v336
          %353 = vst [vmem:[#allocation2 + $0x88] sm:$0xff] %v337
          %354 = vst [vmem:[#allocation2 + $0x98] sm:$0xff] %v338
          %355 = vst [vmem:[#allocation2 + $0xa8] sm:$0xff] %v339
          %356 = vst [vmem:[#allocation2 + $0xb8] sm:$0xff] %v340
          %357 = vst [vmem:[#allocation2 + $0xc8] sm:$0xff] %v341
          %358 = vst [vmem:[#allocation2 + $0xd8] sm:$0xff] %v342
          %359 = vst [vmem:[#allocation2 + $0xe8] sm:$0xff] %v343
          %360 = vst [vmem:[#allocation2 + $0xf8] sm:$0xff] %v344
          %361 = vst [vmem:[#allocation2] sm:$0xff] 0.0
          %362 = vst [vmem:[#allocation2 + $0x10] sm:$0xff] 0.0
          %363 = vst [vmem:[#allocation2 + $0x20] sm:$0xff] 0.0
          %364 = vst [vmem:[#allocation2 + $0x30] sm:$0xff] 0.0
          %365 = vst [vmem:[#allocation2 + $0x40] sm:$0xff] 0.0
          %366 = vst [vmem:[#allocation2 + $0x50] sm:$0xff] 0.0
          %367 = vst [vmem:[#allocation2 + $0x60] sm:$0xff] 0.0
          %368 = vst [vmem:[#allocation2 + $0x70] sm:$0xff] 0.0
          %369 = vst [vmem:[#allocation2 + $0x80] sm:$0xff] 0.0
          %370 = vst [vmem:[#allocation2 + $0x90] sm:$0xff] 0.0
          %371 = vst [vmem:[#allocation2 + $0xa0] sm:$0xff] 0.0
          %372 = vst [vmem:[#allocation2 + $0xb0] sm:$0xff] 0.0
          %373 = vst [vmem:[#allocation2 + $0xc0] sm:$0xff] 0.0
          %374 = vst [vmem:[#allocation2 + $0xd0] sm:$0xff] 0.0
          %375 = vst [vmem:[#allocation2 + $0xe0] sm:$0xff] 0.0
          %376 = vst [vmem:[#allocation2 + $0xf0] sm:$0xff] 0.0
        $region60: #{tpu_custom_call.1} parent=35 // pred_fallthru
          _
        %s377 = smul.u32 %s23, 128
        %s378 = scalar_lea.vmem [#allocation10], %s377
        %v379 = vld [vmem:[%s378] sm:$0xff]
        %v380 = vld [vmem:[%s378 + $0x8] sm:$0xff]
        %v381 = vld [vmem:[%s378 + $0x10] sm:$0xff]
        %v382 = vld [vmem:[%s378 + $0x18] sm:$0xff]
        %v383 = vld [vmem:[%s378 + $0x20] sm:$0xff]
        %v384 = vld [vmem:[%s378 + $0x28] sm:$0xff]
        %v385 = vld [vmem:[%s378 + $0x30] sm:$0xff]
        %v386 = vld [vmem:[%s378 + $0x38] sm:$0xff]
        %v387 = vld [vmem:[%s378 + $0x40] sm:$0xff]
        %v388 = vld [vmem:[%s378 + $0x48] sm:$0xff]
        %v389 = vld [vmem:[%s378 + $0x50] sm:$0xff]
        %v390 = vld [vmem:[%s378 + $0x58] sm:$0xff]
        %v391 = vld [vmem:[%s378 + $0x60] sm:$0xff]
        %v392 = vld [vmem:[%s378 + $0x68] sm:$0xff]
        %v393 = vld [vmem:[%s378 + $0x70] sm:$0xff]
        %v394 = vld [vmem:[%s378 + $0x78] sm:$0xff]
        %v395 = vld [vmem:[#allocation2] sm:$0xff]
        %v396 = vld [vmem:[#allocation2 + $0x10] sm:$0xff]
        %v397 = vld [vmem:[#allocation2 + $0x20] sm:$0xff]
        %v398 = vld [vmem:[#allocation2 + $0x30] sm:$0xff]
        %v399 = vld [vmem:[#allocation2 + $0x40] sm:$0xff]
        %v400 = vld [vmem:[#allocation2 + $0x50] sm:$0xff]
        %v401 = vld [vmem:[#allocation2 + $0x60] sm:$0xff]
        %v402 = vld [vmem:[#allocation2 + $0x70] sm:$0xff]
        %v403 = vld [vmem:[#allocation2 + $0x80] sm:$0xff]
        %v404 = vld [vmem:[#allocation2 + $0x90] sm:$0xff]
        %v405 = vld [vmem:[#allocation2 + $0xa0] sm:$0xff]
        %v406 = vld [vmem:[#allocation2 + $0xb0] sm:$0xff]
        %v407 = vld [vmem:[#allocation2 + $0xc0] sm:$0xff]
        %v408 = vld [vmem:[#allocation2 + $0xd0] sm:$0xff]
        %v409 = vld [vmem:[#allocation2 + $0xe0] sm:$0xff]
        %v410 = vld [vmem:[#allocation2 + $0xf0] sm:$0xff]
        %v411 = vld [vmem:[#allocation3] sm:$0xff]
        %v412 = vld [vmem:[#allocation3 + $0x8] sm:$0xff]
        %v413 = vld [vmem:[#allocation3 + $0x10] sm:$0xff]
        %v414 = vld [vmem:[#allocation3 + $0x18] sm:$0xff]
        %v415 = vld [vmem:[#allocation3 + $0x20] sm:$0xff]
        %v416 = vld [vmem:[#allocation3 + $0x28] sm:$0xff]
        %v417 = vld [vmem:[#allocation3 + $0x30] sm:$0xff]
        %v418 = vld [vmem:[#allocation3 + $0x38] sm:$0xff]
        %v419 = vld [vmem:[#allocation3 + $0x40] sm:$0xff]
        %v420 = vld [vmem:[#allocation3 + $0x48] sm:$0xff]
        %v421 = vld [vmem:[#allocation3 + $0x50] sm:$0xff]
        %v422 = vld [vmem:[#allocation3 + $0x58] sm:$0xff]
        %v423 = vld [vmem:[#allocation3 + $0x60] sm:$0xff]
        %v424 = vld [vmem:[#allocation3 + $0x68] sm:$0xff]
        %v425 = vld [vmem:[#allocation3 + $0x70] sm:$0xff]
        %v426 = vld [vmem:[#allocation3 + $0x78] sm:$0xff]
        %427 = vmatpush.msra.mxu0 %v394
        %428 = vmatpush.msra.mxu0 %v393
        %429 = vmatpush.msra.mxu0 %v392
        %430 = vmatpush.msra.mxu0 %v391
        %431 = vmatpush.msra.mxu0 %v390
        %432 = vmatpush.msra.mxu0 %v389
        %433 = vmatpush.msra.mxu0 %v388
        %434 = vmatpush.msra.mxu0 %v387
        %435 = vmatpush.msra.mxu0 %v386
        %436 = vmatpush.msra.mxu0 %v385
        %437 = vmatpush.msra.mxu0 %v384
        %438 = vmatpush.msra.mxu0 %v383
        %439 = vmatpush.msra.mxu0 %v382
        %440 = vmatpush.msra.mxu0 %v381
        %441 = vmatpush.msra.mxu0 %v380
        %442 = vmatpush.msra.mxu0 %v379
        %443 = vmatmul.f32.gmra.mxu0 %v411
        %v444 = vpop.f32.mrf.mxu0
        %v445 = vadd.f32 0.0, %v444
        %446 = vmatmul.f32.gmra.mxu0 %v412
        %v447 = vpop.f32.mrf.mxu0
        %v448 = vadd.f32 0.0, %v447
        %449 = vmatmul.f32.gmra.mxu0 %v413
        %v450 = vpop.f32.mrf.mxu0
        %v451 = vadd.f32 0.0, %v450
        %452 = vmatmul.f32.gmra.mxu0 %v414
        %v453 = vpop.f32.mrf.mxu0
        %v454 = vadd.f32 0.0, %v453
        %455 = vmatmul.f32.gmra.mxu0 %v415
        %v456 = vpop.f32.mrf.mxu0
        %v457 = vadd.f32 0.0, %v456
        %458 = vmatmul.f32.gmra.mxu0 %v416
        %v459 = vpop.f32.mrf.mxu0
        %v460 = vadd.f32 0.0, %v459
        %461 = vmatmul.f32.gmra.mxu0 %v417
        %v462 = vpop.f32.mrf.mxu0
        %v463 = vadd.f32 0.0, %v462
        %464 = vmatmul.f32.gmra.mxu0 %v418
        %v465 = vpop.f32.mrf.mxu0
        %v466 = vadd.f32 0.0, %v465
        %467 = vmatmul.f32.gmra.mxu0 %v419
        %v468 = vpop.f32.mrf.mxu0
        %v469 = vadd.f32 0.0, %v468
        %470 = vmatmul.f32.gmra.mxu0 %v420
        %v471 = vpop.f32.mrf.mxu0
        %v472 = vadd.f32 0.0, %v471
        %473 = vmatmul.f32.gmra.mxu0 %v421
        %v474 = vpop.f32.mrf.mxu0
        %v475 = vadd.f32 0.0, %v474
        %476 = vmatmul.f32.gmra.mxu0 %v422
        %v477 = vpop.f32.mrf.mxu0
        %v478 = vadd.f32 0.0, %v477
        %479 = vmatmul.f32.gmra.mxu0 %v423
        %v480 = vpop.f32.mrf.mxu0
        %v481 = vadd.f32 0.0, %v480
        %482 = vmatmul.f32.gmra.mxu0 %v424
        %v483 = vpop.f32.mrf.mxu0
        %v484 = vadd.f32 0.0, %v483
        %485 = vmatmul.f32.gmra.mxu0 %v425
        %v486 = vpop.f32.mrf.mxu0
        %v487 = vadd.f32 0.0, %v486
        %488 = vmatmul.f32.gmra.mxu0 %v426
        %v489 = vpop.f32.mrf.mxu0
        %v490 = vadd.f32 0.0, %v489
        %491 = vdwg.mxu0
        %v492 = vadd.f32 %v395, %v445
        %v493 = vadd.f32 %v396, %v448
        %v494 = vadd.f32 %v397, %v451
        %v495 = vadd.f32 %v398, %v454
        %v496 = vadd.f32 %v399, %v457
        %v497 = vadd.f32 %v400, %v460
        %v498 = vadd.f32 %v401, %v463
        %v499 = vadd.f32 %v402, %v466
        %v500 = vadd.f32 %v403, %v469
        %v501 = vadd.f32 %v404, %v472
        %v502 = vadd.f32 %v405, %v475
        %v503 = vadd.f32 %v406, %v478
        %v504 = vadd.f32 %v407, %v481
        %v505 = vadd.f32 %v408, %v484
        %v506 = vadd.f32 %v409, %v487
        %v507 = vadd.f32 %v410, %v490
        %508 = vst [vmem:[#allocation2] sm:$0xff] %v492
        %509 = vst [vmem:[#allocation2 + $0x10] sm:$0xff] %v493
        %510 = vst [vmem:[#allocation2 + $0x20] sm:$0xff] %v494
        %511 = vst [vmem:[#allocation2 + $0x30] sm:$0xff] %v495
        %512 = vst [vmem:[#allocation2 + $0x40] sm:$0xff] %v496
        %513 = vst [vmem:[#allocation2 + $0x50] sm:$0xff] %v497
        %514 = vst [vmem:[#allocation2 + $0x60] sm:$0xff] %v498
        %515 = vst [vmem:[#allocation2 + $0x70] sm:$0xff] %v499
        %516 = vst [vmem:[#allocation2 + $0x80] sm:$0xff] %v500
        %517 = vst [vmem:[#allocation2 + $0x90] sm:$0xff] %v501
        %518 = vst [vmem:[#allocation2 + $0xa0] sm:$0xff] %v502
        %519 = vst [vmem:[#allocation2 + $0xb0] sm:$0xff] %v503
        %520 = vst [vmem:[#allocation2 + $0xc0] sm:$0xff] %v504
        %521 = vst [vmem:[#allocation2 + $0xd0] sm:$0xff] %v505
        %522 = vst [vmem:[#allocation2 + $0xe0] sm:$0xff] %v506
        %523 = vst [vmem:[#allocation2 + $0xf0] sm:$0xff] %v507
        // Predicated region
        $region61: #{tpu_custom_call.1} parent=35 // pred_check
          %p524 = pneg %p289
        $region62: #{tpu_custom_call.1} parent=35 // pred_check_branch
          %526 = sbr.rel (%p524) target = $region64
        $region63: #{tpu_custom_call.1} parent=35 // pred_region
          %v527 = vld [vmem:[#allocation2] sm:$0xff]
          %v528 = vld [vmem:[#allocation2 + $0x8] sm:$0xff]
          %v529 = vld [vmem:[#allocation2 + $0x10] sm:$0xff]
          %v530 = vld [vmem:[#allocation2 + $0x18] sm:$0xff]
          %v531 = vld [vmem:[#allocation2 + $0x20] sm:$0xff]
          %v532 = vld [vmem:[#allocation2 + $0x28] sm:$0xff]
          %v533 = vld [vmem:[#allocation2 + $0x30] sm:$0xff]
          %v534 = vld [vmem:[#allocation2 + $0x38] sm:$0xff]
          %v535 = vld [vmem:[#allocation2 + $0x40] sm:$0xff]
          %v536 = vld [vmem:[#allocation2 + $0x48] sm:$0xff]
          %v537 = vld [vmem:[#allocation2 + $0x50] sm:$0xff]
          %v538 = vld [vmem:[#allocation2 + $0x58] sm:$0xff]
          %v539 = vld [vmem:[#allocation2 + $0x60] sm:$0xff]
          %v540 = vld [vmem:[#allocation2 + $0x68] sm:$0xff]
          %v541 = vld [vmem:[#allocation2 + $0x70] sm:$0xff]
          %v542 = vld [vmem:[#allocation2 + $0x78] sm:$0xff]
          %v543 = vld [vmem:[#allocation2 + $0x80] sm:$0xff]
          %v544 = vld [vmem:[#allocation2 + $0x88] sm:$0xff]
          %v545 = vld [vmem:[#allocation2 + $0x90] sm:$0xff]
          %v546 = vld [vmem:[#allocation2 + $0x98] sm:$0xff]
          %v547 = vld [vmem:[#allocation2 + $0xa0] sm:$0xff]
          %v548 = vld [vmem:[#allocation2 + $0xa8] sm:$0xff]
          %v549 = vld [vmem:[#allocation2 + $0xb0] sm:$0xff]
          %v550 = vld [vmem:[#allocation2 + $0xb8] sm:$0xff]
          %v551 = vld [vmem:[#allocation2 + $0xc0] sm:$0xff]
          %v552 = vld [vmem:[#allocation2 + $0xc8] sm:$0xff]
          %v553 = vld [vmem:[#allocation2 + $0xd0] sm:$0xff]
          %v554 = vld [vmem:[#allocation2 + $0xd8] sm:$0xff]
          %v555 = vld [vmem:[#allocation2 + $0xe0] sm:$0xff]
          %v556 = vld [vmem:[#allocation2 + $0xe8] sm:$0xff]
          %v557 = vld [vmem:[#allocation2 + $0xf0] sm:$0xff]
          %v558 = vld [vmem:[#allocation2 + $0xf8] sm:$0xff]
          %v559 = vld [vmem:[%s254] sm:$0xff]
          %v560 = vld [vmem:[%s254 + $0x8] sm:$0xff]
          %v561 = vld [vmem:[%s254 + $0x10] sm:$0xff]
          %v562 = vld [vmem:[%s254 + $0x18] sm:$0xff]
          %v563 = vld [vmem:[%s254 + $0x20] sm:$0xff]
          %v564 = vld [vmem:[%s254 + $0x28] sm:$0xff]
          %v565 = vld [vmem:[%s254 + $0x30] sm:$0xff]
          %v566 = vld [vmem:[%s254 + $0x38] sm:$0xff]
          %v567 = vld [vmem:[%s254 + $0x40] sm:$0xff]
          %v568 = vld [vmem:[%s254 + $0x48] sm:$0xff]
          %v569 = vld [vmem:[%s254 + $0x50] sm:$0xff]
          %v570 = vld [vmem:[%s254 + $0x58] sm:$0xff]
          %v571 = vld [vmem:[%s254 + $0x60] sm:$0xff]
          %v572 = vld [vmem:[%s254 + $0x68] sm:$0xff]
          %v573 = vld [vmem:[%s254 + $0x70] sm:$0xff]
          %v574 = vld [vmem:[%s254 + $0x78] sm:$0xff]
          %v575 = vld [vmem:[%s254 + $0x80] sm:$0xff]
          %v576 = vld [vmem:[%s254 + $0x88] sm:$0xff]
          %v577 = vld [vmem:[%s254 + $0x90] sm:$0xff]
          %v578 = vld [vmem:[%s254 + $0x98] sm:$0xff]
          %v579 = vld [vmem:[%s254 + $0xa0] sm:$0xff]
          %v580 = vld [vmem:[%s254 + $0xa8] sm:$0xff]
          %v581 = vld [vmem:[%s254 + $0xb0] sm:$0xff]
          %v582 = vld [vmem:[%s254 + $0xb8] sm:$0xff]
          %v583 = vld [vmem:[%s254 + $0xc0] sm:$0xff]
          %v584 = vld [vmem:[%s254 + $0xc8] sm:$0xff]
          %v585 = vld [vmem:[%s254 + $0xd0] sm:$0xff]
          %v586 = vld [vmem:[%s254 + $0xd8] sm:$0xff]
          %v587 = vld [vmem:[%s254 + $0xe0] sm:$0xff]
          %v588 = vld [vmem:[%s254 + $0xe8] sm:$0xff]
          %v589 = vld [vmem:[%s254 + $0xf0] sm:$0xff]
          %v590 = vld [vmem:[%s254 + $0xf8] sm:$0xff]
          %v591 = vld [vmem:[%s263] sm:$0x1]
          %v593 = vperm.slane %v591, 0
          %595 = vmatpush.msra.mxu0 %v574
          %596 = vmatpush.msra.mxu0 %v573
          %597 = vmatpush.msra.mxu0 %v572
          %598 = vmatpush.msra.mxu0 %v571
          %599 = vmatpush.msra.mxu0 %v570
          %600 = vmatpush.msra.mxu0 %v569
          %601 = vmatpush.msra.mxu0 %v568
          %602 = vmatpush.msra.mxu0 %v567
          %603 = vmatpush.msra.mxu0 %v566
          %604 = vmatpush.msra.mxu0 %v565
          %605 = vmatpush.msra.mxu0 %v564
          %606 = vmatpush.msra.mxu0 %v563
          %607 = vmatpush.msra.mxu0 %v562
          %608 = vmatpush.msra.mxu0 %v561
          %609 = vmatpush.msra.mxu0 %v560
          %610 = vmatpush.msra.mxu0 %v559
          %611 = vmatmul.f32.gmra.mxu0 %v527
          %v612 = vpop.f32.mrf.mxu0
          %v613 = vadd.f32 %v593, %v612
          %614 = vmatmul.f32.gmra.mxu0 %v529
          %v615 = vpop.f32.mrf.mxu0
          %v616 = vadd.f32 %v593, %v615
          %617 = vmatmul.f32.gmra.mxu0 %v531
          %v618 = vpop.f32.mrf.mxu0
          %v619 = vadd.f32 %v593, %v618
          %620 = vmatmul.f32.gmra.mxu0 %v533
          %v621 = vpop.f32.mrf.mxu0
          %v622 = vadd.f32 %v593, %v621
          %623 = vmatmul.f32.gmra.mxu0 %v535
          %v624 = vpop.f32.mrf.mxu0
          %v625 = vadd.f32 %v593, %v624
          %626 = vmatmul.f32.gmra.mxu0 %v537
          %v627 = vpop.f32.mrf.mxu0
          %v628 = vadd.f32 %v593, %v627
          %629 = vmatmul.f32.gmra.mxu0 %v539
          %v630 = vpop.f32.mrf.mxu0
          %v631 = vadd.f32 %v593, %v630
          %632 = vmatmul.f32.gmra.mxu0 %v541
          %v633 = vpop.f32.mrf.mxu0
          %v634 = vadd.f32 %v593, %v633
          %635 = vmatmul.f32.gmra.mxu0 %v543
          %v636 = vpop.f32.mrf.mxu0
          %v637 = vadd.f32 %v593, %v636
          %638 = vmatmul.f32.gmra.mxu0 %v545
          %v639 = vpop.f32.mrf.mxu0
          %v640 = vadd.f32 %v593, %v639
          %641 = vmatmul.f32.gmra.mxu0 %v547
          %v642 = vpop.f32.mrf.mxu0
          %v643 = vadd.f32 %v593, %v642
          %644 = vmatmul.f32.gmra.mxu0 %v549
          %v645 = vpop.f32.mrf.mxu0
          %v646 = vadd.f32 %v593, %v645
          %647 = vmatmul.f32.gmra.mxu0 %v551
          %v648 = vpop.f32.mrf.mxu0
          %v649 = vadd.f32 %v593, %v648
          %650 = vmatmul.f32.gmra.mxu0 %v553
          %v651 = vpop.f32.mrf.mxu0
          %v652 = vadd.f32 %v593, %v651
          %653 = vmatmul.f32.gmra.mxu0 %v555
          %v654 = vpop.f32.mrf.mxu0
          %v655 = vadd.f32 %v593, %v654
          %656 = vmatmul.f32.gmra.mxu0 %v557
          %v657 = vpop.f32.mrf.mxu0
          %v658 = vadd.f32 %v593, %v657
          %659 = vdwg.mxu0
          %660 = vmatpush.msra.mxu0 %v590
          %661 = vmatpush.msra.mxu0 %v589
          %662 = vmatpush.msra.mxu0 %v588
          %663 = vmatpush.msra.mxu0 %v587
          %664 = vmatpush.msra.mxu0 %v586
          %665 = vmatpush.msra.mxu0 %v585
          %666 = vmatpush.msra.mxu0 %v584
          %667 = vmatpush.msra.mxu0 %v583
          %668 = vmatpush.msra.mxu0 %v582
          %669 = vmatpush.msra.mxu0 %v581
          %670 = vmatpush.msra.mxu0 %v580
          %671 = vmatpush.msra.mxu0 %v579
          %672 = vmatpush.msra.mxu0 %v578
          %673 = vmatpush.msra.mxu0 %v577
          %674 = vmatpush.msra.mxu0 %v576
          %675 = vmatpush.msra.mxu0 %v575
          %676 = vmatmul.f32.gmra.mxu0 %v528
          %v677 = vpop.f32.mrf.mxu0
          %v678 = vadd.f32 %v613, %v677
          %679 = vmatmul.f32.gmra.mxu0 %v530
          %v680 = vpop.f32.mrf.mxu0
          %v681 = vadd.f32 %v616, %v680
          %682 = vmatmul.f32.gmra.mxu0 %v532
          %v683 = vpop.f32.mrf.mxu0
          %v684 = vadd.f32 %v619, %v683
          %685 = vmatmul.f32.gmra.mxu0 %v534
          %v686 = vpop.f32.mrf.mxu0
          %v687 = vadd.f32 %v622, %v686
          %688 = vmatmul.f32.gmra.mxu0 %v536
          %v689 = vpop.f32.mrf.mxu0
          %v690 = vadd.f32 %v625, %v689
          %691 = vmatmul.f32.gmra.mxu0 %v538
          %v692 = vpop.f32.mrf.mxu0
          %v693 = vadd.f32 %v628, %v692
          %694 = vmatmul.f32.gmra.mxu0 %v540
          %v695 = vpop.f32.mrf.mxu0
          %v696 = vadd.f32 %v631, %v695
          %697 = vmatmul.f32.gmra.mxu0 %v542
          %v698 = vpop.f32.mrf.mxu0
          %v699 = vadd.f32 %v634, %v698
          %700 = vmatmul.f32.gmra.mxu0 %v544
          %v701 = vpop.f32.mrf.mxu0
          %v702 = vadd.f32 %v637, %v701
          %703 = vmatmul.f32.gmra.mxu0 %v546
          %v704 = vpop.f32.mrf.mxu0
          %v705 = vadd.f32 %v640, %v704
          %706 = vmatmul.f32.gmra.mxu0 %v548
          %v707 = vpop.f32.mrf.mxu0
          %v708 = vadd.f32 %v643, %v707
          %709 = vmatmul.f32.gmra.mxu0 %v550
          %v710 = vpop.f32.mrf.mxu0
          %v711 = vadd.f32 %v646, %v710
          %712 = vmatmul.f32.gmra.mxu0 %v552
          %v713 = vpop.f32.mrf.mxu0
          %v714 = vadd.f32 %v649, %v713
          %715 = vmatmul.f32.gmra.mxu0 %v554
          %v716 = vpop.f32.mrf.mxu0
          %v717 = vadd.f32 %v652, %v716
          %718 = vmatmul.f32.gmra.mxu0 %v556
          %v719 = vpop.f32.mrf.mxu0
          %v720 = vadd.f32 %v655, %v719
          %721 = vmatmul.f32.gmra.mxu0 %v558
          %v722 = vpop.f32.mrf.mxu0
          %v723 = vadd.f32 %v658, %v722
          %724 = vdwg.mxu0
          %p725 = scmp.lt.s32.totalorder %s22, 3
          %v726 = vmax.f32 %v678, 0.0
          %v727 = vmax.f32 %v681, 0.0
          %v728 = vmax.f32 %v684, 0.0
          %v729 = vmax.f32 %v687, 0.0
          %v730 = vmax.f32 %v690, 0.0
          %v731 = vmax.f32 %v693, 0.0
          %v732 = vmax.f32 %v696, 0.0
          %v733 = vmax.f32 %v699, 0.0
          %v734 = vmax.f32 %v702, 0.0
          %v735 = vmax.f32 %v705, 0.0
          %v736 = vmax.f32 %v708, 0.0
          %v737 = vmax.f32 %v711, 0.0
          %v738 = vmax.f32 %v714, 0.0
          %v739 = vmax.f32 %v717, 0.0
          %v740 = vmax.f32 %v720, 0.0
          %v741 = vmax.f32 %v723, 0.0
          %s742 = scalar_select %p725, 1, 0
          %v743 = vstv %s742
          %vm744 = vcmp.eq.s32.totalorder %v743, 1
          %v745 = vsel %vm744, %v726, %v678
          %v746 = vsel %vm744, %v727, %v681
          %v747 = vsel %vm744, %v728, %v684
          %v748 = vsel %vm744, %v729, %v687
          %v749 = vsel %vm744, %v730, %v690
          %v750 = vsel %vm744, %v731, %v693
          %v751 = vsel %vm744, %v732, %v696
          %v752 = vsel %vm744, %v733, %v699
          %v753 = vsel %vm744, %v734, %v702
          %v754 = vsel %vm744, %v735, %v705
          %v755 = vsel %vm744, %v736, %v708
          %v756 = vsel %vm744, %v737, %v711
          %v757 = vsel %vm744, %v738, %v714
          %v758 = vsel %vm744, %v739, %v717
          %v759 = vsel %vm744, %v740, %v720
          %v760 = vsel %vm744, %v741, %v723
          %761 = vst [vmem:[#allocation10] sm:$0xff] %v745
          %762 = vst [vmem:[#allocation10 + $0x8] sm:$0xff] %v746
          %763 = vst [vmem:[#allocation10 + $0x10] sm:$0xff] %v747
          %764 = vst [vmem:[#allocation10 + $0x18] sm:$0xff] %v748
          %765 = vst [vmem:[#allocation10 + $0x20] sm:$0xff] %v749
          %766 = vst [vmem:[#allocation10 + $0x28] sm:$0xff] %v750
          %767 = vst [vmem:[#allocation10 + $0x30] sm:$0xff] %v751
          %768 = vst [vmem:[#allocation10 + $0x38] sm:$0xff] %v752
          %769 = vst [vmem:[#allocation10 + $0x40] sm:$0xff] %v753
          %770 = vst [vmem:[#allocation10 + $0x48] sm:$0xff] %v754
          %771 = vst [vmem:[#allocation10 + $0x50] sm:$0xff] %v755
          %772 = vst [vmem:[#allocation10 + $0x58] sm:$0xff] %v756
          %773 = vst [vmem:[#allocation10 + $0x60] sm:$0xff] %v757
          %774 = vst [vmem:[#allocation10 + $0x68] sm:$0xff] %v758
          %775 = vst [vmem:[#allocation10 + $0x70] sm:$0xff] %v759
          %776 = vst [vmem:[#allocation10 + $0x78] sm:$0xff] %v760
        $region64: #{tpu_custom_call.1} parent=35 // pred_fallthru
          _
        // Predicated region
        $region65: #{tpu_custom_call.1} parent=35 // pred_check
          %p777 = pneg %p142
        $region66: #{tpu_custom_call.1} parent=35 // pred_check_branch
          %779 = sbr.rel (%p777) target = $region68
        $region67: #{tpu_custom_call.1} parent=35 // pred_region
          %781 = vsyncadd [#allocation5], 0
          %s782 = sshll.u32 [#allocation10], 4
          %s783 = int_to_ptr.vmem [resolvable:$true] %s782
          %s784 = sshll.u32 %s4, 4
          %s785 = int_to_ptr.hbm [resolvable:$true] %s784
          %790 = dma.vmem_to_hbm [thread:$0]  %s783, 2048, %s785, [#allocation5], 128, 128, 8
        $region68: #{tpu_custom_call.1} parent=35 // pred_fallthru
          _
        // Predicated region
        $region69: #{tpu_custom_call.1} parent=35 // pred_check
          %p791 = pneg %p142
        $region70: #{tpu_custom_call.1} parent=35 // pred_check_branch
          %793 = sbr.rel (%p791) target = $region72
        $region71: #{tpu_custom_call.1} parent=35 // pred_region
          %795 = dma.done [#allocation5], 2048
        $region72: #{tpu_custom_call.1} parent=35 // pred_fallthru
          _
      $region36: #{tpu_custom_call.1} parent=5 // pred_fallthru
        _
      %p796 = scmp.le.s32.totalorder 2, %s13
      // Predicated region
      $region73: #{tpu_custom_call.1} parent=5 // pred_check
        %p797 = pneg %p796
      $region74: #{tpu_custom_call.1} parent=5 // pred_check_branch
        %799 = sbr.rel (%p797) target = $region76
      $region75: #{tpu_custom_call.1} parent=5 // pred_region
        %s800 = ssub.s32 %s13, 2
      $region76: #{tpu_custom_call.1} parent=5 // pred_fallthru
        _
    $region6: #{tpu_custom_call.1} parent=1 // loop_footer
      %s17 = sadd.s32 1, %s13
    $region7: #{tpu_custom_call.1} parent=1 // loop_footer_branch
      %12 = sbr.rel target = $region3
    $region8: #{tpu_custom_call.1} parent=1 // loop_exit
      _
    %801 = vsyncpa [#allocation4], 1
    %s802 = scalar_lea.sflag [#allocation4], 1
    %803 = vsyncpa %s802, 1
    %804 = vsyncpa [#allocation7], 1
    %805 = vsyncpa [#allocation5], 1
    %s806 = scalar_lea.sflag [#allocation5], 1
    %807 = vsyncpa %s806, 1

</llo_original>
